<compile_context>
chip_gen: v7x
topology: tpu7x:2x2x1
jax: 0.10.0
libtpu: 0.0.40
codegen_flags: <defaults>
</compile_context>

<pallas_src>
import jax
import jax.numpy as jnp
from jax.experimental import pallas as pl
from jax.experimental.pallas import tpu as pltpu


# ---------------------------------------------------------------------------
# Kernels
# ---------------------------------------------------------------------------

def _ffn_kernel_resident(h_ref, sh_ref, tmk_ref, omk_ref, tmr_ref, omr_ref,
                         wk_ref, wr_ref, wv_ref, out_ref):
    """Weights-resident plan: grid = (BT // T_TILE,).

    All three weights have constant index maps (fetched once for the whole
    call); the full key->relu^2->value chain and the receptance branch run per
    sequence tile with no reduction axis.
    """
    h = h_ref[...]                                   # (T_TILE, H) f32
    sh = sh_ref[...]                                 # (T_TILE, H) f32 (pre-shifted)
    key_in = (h * tmk_ref[...] + sh * omk_ref[...]).astype(jnp.bfloat16)
    rec_in = (h * tmr_ref[...] + sh * omr_ref[...]).astype(jnp.bfloat16)

    k = jnp.dot(key_in, wk_ref[...], preferred_element_type=jnp.float32)
    k = jnp.square(jnp.maximum(k, 0.0))
    v = jnp.dot(k.astype(jnp.bfloat16), wv_ref[...],
                preferred_element_type=jnp.float32)
    r = jax.nn.sigmoid(jnp.dot(rec_in, wr_ref[...],
                               preferred_element_type=jnp.float32))
    out_ref[...] = (r * v).astype(out_ref.dtype)


def _make_ffn_kernel_i_tiled(acc_in_out):
    """I-tiled plan: grid = (BT // T_TILE, I // I_TILE); trailing axis reduces
    over the intermediate dimension.

    * The key mix (+ bf16 cast) and the receptance branch are hoisted into the
      i == 0 step (VMEM scratch), so each subsequent I step is just the two
      MXU matmuls.
    * When `acc_in_out` (f32 output) the value chain accumulates directly into
      out_ref, saving a (T_TILE, H) f32 scratch buffer.
    """
    def kernel(h_ref, sh_ref, tmk_ref, omk_ref, tmr_ref, omr_ref,
               wk_ref, wr_ref, wv_ref, out_ref, kin_ref, r_ref, *maybe_acc):
        i = pl.program_id(1)
        acc_ref = out_ref if acc_in_out else maybe_acc[0]

        @pl.when(i == 0)
        def _init():
            h = h_ref[...]
            sh = sh_ref[...]
            # Hoisted: computed once per T tile, reused for every I step.
            kin_ref[...] = (h * tmk_ref[...] + sh * omk_ref[...]
                            ).astype(jnp.bfloat16)
            # Receptance branch is independent of the k->v chain: issue its
            # matmul on the first I step so the MXU has work while the first
            # Wk / Wv slices stream.
            rec_in = (h * tmr_ref[...] + sh * omr_ref[...]).astype(jnp.bfloat16)
            r_ref[...] = jax.nn.sigmoid(
                jnp.dot(rec_in, wr_ref[...], preferred_element_type=jnp.float32))
            acc_ref[...] = jnp.zeros_like(acc_ref)

        k = jnp.dot(kin_ref[...], wk_ref[...], preferred_element_type=jnp.float32)
        k = jnp.square(jnp.maximum(k, 0.0))
        acc_ref[...] += jnp.dot(k.astype(jnp.bfloat16), wv_ref[...],
                                preferred_element_type=jnp.float32)

        @pl.when(i == pl.num_programs(1) - 1)
        def _finalize():
            out_ref[...] = (r_ref[...] * acc_ref[...]).astype(out_ref.dtype)

    return kernel


# ---------------------------------------------------------------------------
# Tile / VMEM planning helpers
# ---------------------------------------------------------------------------

def _vmem_budget_bytes():
    """Generation-aware VMEM budget (~85% of physical capacity); falls back to
    a v7x-safe 64 MiB if the hardware query is unavailable."""
    cap = 64 << 20
    info_fn = getattr(pltpu, "get_tpu_info", None)
    if info_fn is not None:
        try:
            cap = int(info_fn().vmem_capacity_bytes)
        except Exception:  # capability probe only; fall back conservatively.
            pass
    return int(cap * 0.85)


def _pick_tile(n, max_tile, aligns):
    """Largest tile <= max_tile dividing n, preferring coarser alignments;
    falls back to the full extent."""
    if n <= max_tile:
        return n
    for align in aligns:
        t = (max_tile // align) * align
        while t >= align:
            if n % t == 0:
                return t
            t -= align
    return n


def _shrink_tile(n, cur, aligns):
    """Strictly smaller valid tile, or `cur` if none exists."""
    target = cur // 2
    while target >= aligns[-1]:
        t = _pick_tile(n, target, aligns)
        if t < cur:
            return t
        target //= 2
    return cur


def _est_resident(tt, H, I):
    weights = 2 * 2 * (H * I + I * H + H * H)   # bf16 Wk/Wv/Wr, double-buffered
    acts = 2 * 2 * tt * H * 4                   # hidden + shifted tiles (f32, x2 bufs)
    outs = 2 * tt * H * 4                       # output tile (x2 bufs)
    inter = tt * I * 6 + tt * H * 12            # k (f32 + bf16) + mix/r temporaries
    return weights + acts + outs + inter + (2 << 20)


def _est_i_tiled(tt, it, H, acc_in_out):
    weights = 2 * 2 * (H * it + it * H) + 2 * 2 * H * H   # Wk/Wv slices + Wr (bf16, x2 bufs)
    acts = 2 * 2 * tt * H * 4
    outs = 2 * tt * H * 4
    scratch = tt * H * (2 + 4) + (0 if acc_in_out else tt * H * 4)
    inter = tt * it * 6
    return weights + acts + outs + scratch + inter + (2 << 20)


# ---------------------------------------------------------------------------
# Wrapper
# ---------------------------------------------------------------------------

def rwkv_feed_forward(hidden, time_mix_key, time_mix_receptance,
                      key_weight, receptance_weight, value_weight, *,
                      t_tile_max=512, i_tile_max=1024, force_i_tiled=False):
    """RWKV-5 FFN forward (state=None).

    hidden: (B, T, H) f32.  time_mix_*: broadcastable to (H,).
    Weights in PyTorch nn.Linear layout (out_features, in_features):
      key_weight (I, H), receptance_weight (H, H), value_weight (H, I).
    """
    B, T, H = hidden.shape
    I = key_weight.shape[0]
    BT = B * T

    # time_shift (ZeroPad2d((0,0,1,-1))) hoisted to the wrapper, then batch is
    # flattened into the sequence axis.
    shifted = jnp.concatenate(
        [jnp.zeros((B, 1, H), hidden.dtype), hidden[:, :-1]], axis=1)
    h_flat = hidden.reshape(BT, H)
    sh_flat = shifted.reshape(BT, H)

    tmk = jnp.asarray(time_mix_key, jnp.float32).reshape(1, H)
    tmr = jnp.asarray(time_mix_receptance, jnp.float32).reshape(1, H)
    omk = 1.0 - tmk          # (1 - time_mix_*) precomputed in the wrapper
    omr = 1.0 - tmr

    # bf16 weights (pre-transposed to (in, out)): halve DMA / VMEM residency,
    # run the MXU at native bf16 rate with f32 accumulation.
    wk = jnp.asarray(key_weight).T.astype(jnp.bfloat16)          # (H, I)
    wr = jnp.asarray(receptance_weight).T.astype(jnp.bfloat16)   # (H, H)
    wv = jnp.asarray(value_weight).T.astype(jnp.bfloat16)        # (I, H)

    budget = _vmem_budget_bytes()
    vmem_limit = int(max(32 << 20, budget))
    out_dtype = hidden.dtype
    acc_in_out = out_dtype == jnp.float32

    t_aligns = (256, 128, 16, 8)
    i_aligns = (256, 128)

    mix_specs = [pl.BlockSpec((1, H), None) for _ in range(4)]  # placeholder, rebuilt below

    # ---- plan selection ----------------------------------------------------
    T_TILE = _pick_tile(BT, t_tile_max, t_aligns)
    use_resident = not force_i_tiled
    if use_resident:
        while _est_resident(T_TILE, H, I) > budget:
            nt = _shrink_tile(BT, T_TILE, t_aligns)
            if nt == T_TILE:
                break
            T_TILE = nt
        use_resident = _est_resident(T_TILE, H, I) <= budget

    args = (h_flat, sh_flat, tmk, omk, tmr, omr, wk, wr, wv)

    if use_resident:
        # -------- weights-resident plan: grid over sequence tiles only ------
        const2 = lambda t: (0, 0)
        grid_spec = pltpu.PrefetchScalarGridSpec(
            num_scalar_prefetch=0,
            grid=(BT // T_TILE,),
            in_specs=[
                pl.BlockSpec((T_TILE, H), lambda t: (t, 0)),   # hidden
                pl.BlockSpec((T_TILE, H), lambda t: (t, 0)),   # shifted
                pl.BlockSpec((1, H), const2),                  # time_mix_key
                pl.BlockSpec((1, H), const2),                  # 1 - time_mix_key
                pl.BlockSpec((1, H), const2),                  # time_mix_receptance
                pl.BlockSpec((1, H), const2),                  # 1 - time_mix_receptance
                pl.BlockSpec((H, I), const2),                  # Wk (resident)
                pl.BlockSpec((H, H), const2),                  # Wr (resident)
                pl.BlockSpec((I, H), const2),                  # Wv (resident)
            ],
            out_specs=pl.BlockSpec((T_TILE, H), lambda t: (t, 0)),
        )
        out_flat = pl.pallas_call(
            _ffn_kernel_resident,
            out_shape=jax.ShapeDtypeStruct((BT, H), out_dtype),
            grid_spec=grid_spec,
            compiler_params=pltpu.CompilerParams(
                dimension_semantics=("parallel",),
                vmem_limit_bytes=vmem_limit),
        )(*args)
        return out_flat.reshape(B, T, H)

    # -------- I-tiled plan: trailing reduction over the intermediate dim ----
    T_TILE = _pick_tile(BT, t_tile_max, t_aligns)
    I_TILE = _pick_tile(I, i_tile_max, i_aligns)
    while _est_i_tiled(T_TILE, I_TILE, H, acc_in_out) > budget:
        ni = _shrink_tile(I, I_TILE, i_aligns)
        if ni != I_TILE:
            I_TILE = ni
            continue
        nt = _shrink_tile(BT, T_TILE, t_aligns)
        if nt == T_TILE:
            break
        T_TILE = nt

    const2 = lambda t, i: (0, 0)
    scratch_shapes = [
        pltpu.VMEM((T_TILE, H), jnp.bfloat16),   # hoisted key mix (bf16)
        pltpu.VMEM((T_TILE, H), jnp.float32),    # receptance buffer
    ]
    if not acc_in_out:
        scratch_shapes.append(pltpu.VMEM((T_TILE, H), jnp.float32))  # value acc

    grid_spec = pltpu.PrefetchScalarGridSpec(
        num_scalar_prefetch=0,
        grid=(BT // T_TILE, I // I_TILE),
        in_specs=[
            pl.BlockSpec((T_TILE, H), lambda t, i: (t, 0)),   # hidden
            pl.BlockSpec((T_TILE, H), lambda t, i: (t, 0)),   # shifted
            pl.BlockSpec((1, H), const2),                     # time_mix_key
            pl.BlockSpec((1, H), const2),                     # 1 - time_mix_key
            pl.BlockSpec((1, H), const2),                     # time_mix_receptance
            pl.BlockSpec((1, H), const2),                     # 1 - time_mix_receptance
            pl.BlockSpec((H, I_TILE), lambda t, i: (0, i)),   # Wk slice
            pl.BlockSpec((H, H), const2),                     # Wr
            pl.BlockSpec((I_TILE, H), lambda t, i: (i, 0)),   # Wv slice
        ],
        out_specs=pl.BlockSpec((T_TILE, H), lambda t, i: (t, 0)),
        scratch_shapes=scratch_shapes,
    )
    out_flat = pl.pallas_call(
        _make_ffn_kernel_i_tiled(acc_in_out),
        out_shape=jax.ShapeDtypeStruct((BT, H), out_dtype),
        grid_spec=grid_spec,
        compiler_params=pltpu.CompilerParams(
            dimension_semantics=("parallel", "arbitrary"),
            vmem_limit_bytes=vmem_limit),
    )(*args)
    return out_flat.reshape(B, T, H)


# ---------------------------------------------------------------------------
# Pure-JAX references
# ---------------------------------------------------------------------------

def rwkv_feed_forward_ref_f32(hidden, tmk, tmr, wk, wr, wv):
    """f32 reference mirroring the PyTorch forward (state=None).
    Weights in PyTorch (out, in) layout."""
    B, T, H = hidden.shape
    shifted = jnp.concatenate(
        [jnp.zeros((B, 1, H), hidden.dtype), hidden[:, :-1]], axis=1)
    tmk = tmk.reshape(1, 1, H)
    tmr = tmr.reshape(1, 1, H)
    key_in = hidden * tmk + shifted * (1.0 - tmk)
    rec_in = hidden * tmr + shifted * (1.0 - tmr)
    k = jnp.square(jnp.maximum(key_in @ wk.T, 0.0))
    v = k @ wv.T
    r = jax.nn.sigmoid(rec_in @ wr.T)
    return r * v


def rwkv_feed_forward_ref_bf16(hidden, tmk, tmr, wk, wr, wv):
    """Reference using the same bf16-input / f32-accumulate numerics as the
    kernel."""
    B, T, H = hidden.shape
    shifted = jnp.concatenate(
        [jnp.zeros((B, 1, H), hidden.dtype), hidden[:, :-1]], axis=1)
    tmk = tmk.reshape(1, 1, H)
    tmr = tmr.reshape(1, 1, H)
    key_in = (hidden * tmk + shifted * (1.0 - tmk)).astype(jnp.bfloat16)
    rec_in = (hidden * tmr + shifted * (1.0 - tmr)).astype(jnp.bfloat16)
    wk_b = wk.T.astype(jnp.bfloat16)
    wr_b = wr.T.astype(jnp.bfloat16)
    wv_b = wv.T.astype(jnp.bfloat16)
    kd = jnp.dot(key_in.reshape(B * T, H), wk_b,
                 preferred_element_type=jnp.float32)
    k = jnp.square(jnp.maximum(kd, 0.0)).astype(jnp.bfloat16)
    v = jnp.dot(k, wv_b, preferred_element_type=jnp.float32)
    r = jax.nn.sigmoid(jnp.dot(rec_in.reshape(B * T, H), wr_b,
                               preferred_element_type=jnp.float32))
    return (r * v).reshape(B, T, H)


# ---------------------------------------------------------------------------
# Self-test
# ---------------------------------------------------------------------------

if __name__ == "__main__":
    def make_inputs(key, B, T, H, I):
        ks = jax.random.split(key, 6)
        hidden = jax.random.normal(ks[0], (B, T, H), dtype=jnp.float32)
        tmk = jax.random.uniform(ks[1], (1, 1, H), dtype=jnp.float32)
        tmr = jax.random.uniform(ks[2], (1, 1, H), dtype=jnp.float32)
        # PyTorch nn.Linear weight layout: (out_features, in_features).
        wk = jax.random.normal(ks[3], (I, H), dtype=jnp.float32) * 0.02
        wr = jax.random.normal(ks[4], (H, H), dtype=jnp.float32) * 0.02
        wv = jax.random.normal(ks[5], (H, I), dtype=jnp.float32) * 0.02
        return hidden, tmk, tmr, wk, wr, wv

    def check(out, args, shape):
        ref_b = rwkv_feed_forward_ref_bf16(*args)
        ref_f = rwkv_feed_forward_ref_f32(*args)
        assert out.shape == shape
        assert jnp.allclose(out, ref_b, atol=2e-4, rtol=2e-3), \
            "mismatch vs bf16-matched reference"
        assert jnp.allclose(out, ref_f, atol=5e-2, rtol=5e-2), \
            "mismatch vs f32 reference"

    # Test 1: module-default small config (hidden_size=32 ->
    # intermediate_size = int(32*3.5 // 32 * 32) = 96).  Weights-resident plan.
    B, T, H = 2, 8, 32
    I = int(H * 3.5 // 32 * 32)
    args1 = make_inputs(jax.random.PRNGKey(0), B, T, H, I)
    out1 = jax.block_until_ready(rwkv_feed_forward(*args1))
    check(out1, args1, (B, T, H))

    # Test 2: lane-width shapes, forcing the I-tiled (reduction) plan so both
    # code paths are compiled and validated.
    B2, T2, H2 = 2, 64, 256
    I2 = int(H2 * 3.5 // 32 * 32)   # 896
    args2 = make_inputs(jax.random.PRNGKey(0), B2, T2, H2, I2)
    out2 = jax.block_until_ready(
        rwkv_feed_forward(*args2, force_i_tiled=True, i_tile_max=256))
    check(out2, args2, (B2, T2, H2))

    print("KERNEL_OK")
</pallas_src>

<mosaic_0001>
module attributes {stable_mosaic.version = 11 : i64} {
  func.func @_ffn_kernel_resident(%arg0: i32, %arg1: memref<16x32xf32, #tpu.memory_space<vmem>>, %arg2: memref<16x32xf32, #tpu.memory_space<vmem>>, %arg3: memref<1x32xf32, #tpu.memory_space<vmem>>, %arg4: memref<1x32xf32, #tpu.memory_space<vmem>>, %arg5: memref<1x32xf32, #tpu.memory_space<vmem>>, %arg6: memref<1x32xf32, #tpu.memory_space<vmem>>, %arg7: memref<32x96xbf16, #tpu.memory_space<vmem>>, %arg8: memref<32x32xbf16, #tpu.memory_space<vmem>>, %arg9: memref<96x32xbf16, #tpu.memory_space<vmem>>, %arg10: memref<16x32xf32, #tpu.memory_space<vmem>>) attributes {dimension_semantics = [#tpu.dimension_semantics<parallel>], iteration_bounds = array<i64: 1>, scalar_prefetch = 0 : i64, scratch_operands = 0 : i64, tpu.core_type = #tpu.core_type<tc>, window_params = [{transform_indices = @transform_0, window_bounds = array<i64: 16, 32>}, {transform_indices = @transform_1, window_bounds = array<i64: 16, 32>}, {pipeline_mode = #tpu.pipeline_mode<synchronous>, transform_indices = @transform_2, window_bounds = array<i64: 1, 32>}, {pipeline_mode = #tpu.pipeline_mode<synchronous>, transform_indices = @transform_3, window_bounds = array<i64: 1, 32>}, {pipeline_mode = #tpu.pipeline_mode<synchronous>, transform_indices = @transform_4, window_bounds = array<i64: 1, 32>}, {pipeline_mode = #tpu.pipeline_mode<synchronous>, transform_indices = @transform_5, window_bounds = array<i64: 1, 32>}, {pipeline_mode = #tpu.pipeline_mode<synchronous>, transform_indices = @transform_6, window_bounds = array<i64: 32, 96>}, {pipeline_mode = #tpu.pipeline_mode<synchronous>, transform_indices = @transform_7, window_bounds = array<i64: 32, 32>}, {pipeline_mode = #tpu.pipeline_mode<synchronous>, transform_indices = @transform_8, window_bounds = array<i64: 96, 32>}, {transform_indices = @transform_9, window_bounds = array<i64: 16, 32>}]} {
    %c0 = arith.constant 0 : index
    %c0_0 = arith.constant 0 : index
    %0 = vector.load %arg1[%c0, %c0_0] : memref<16x32xf32, #tpu.memory_space<vmem>>, vector<16x32xf32>
    %c0_1 = arith.constant 0 : index
    %c0_2 = arith.constant 0 : index
    %1 = vector.load %arg2[%c0_1, %c0_2] : memref<16x32xf32, #tpu.memory_space<vmem>>, vector<16x32xf32>
    %c0_3 = arith.constant 0 : index
    %c0_4 = arith.constant 0 : index
    %2 = vector.load %arg3[%c0_3, %c0_4] : memref<1x32xf32, #tpu.memory_space<vmem>>, vector<1x32xf32>
    %3 = vector.broadcast %2 : vector<1x32xf32> to vector<16x32xf32>
    %4 = arith.mulf %0, %3 : vector<16x32xf32>
    %c0_5 = arith.constant 0 : index
    %c0_6 = arith.constant 0 : index
    %5 = vector.load %arg4[%c0_5, %c0_6] : memref<1x32xf32, #tpu.memory_space<vmem>>, vector<1x32xf32>
    %6 = vector.broadcast %5 : vector<1x32xf32> to vector<16x32xf32>
    %7 = arith.mulf %1, %6 : vector<16x32xf32>
    %8 = arith.addf %4, %7 : vector<16x32xf32>
    %9 = arith.truncf %8 : vector<16x32xf32> to vector<16x32xbf16>
    %c0_7 = arith.constant 0 : index
    %c0_8 = arith.constant 0 : index
    %10 = vector.load %arg5[%c0_7, %c0_8] : memref<1x32xf32, #tpu.memory_space<vmem>>, vector<1x32xf32>
    %11 = vector.broadcast %10 : vector<1x32xf32> to vector<16x32xf32>
    %12 = arith.mulf %0, %11 : vector<16x32xf32>
    %c0_9 = arith.constant 0 : index
    %c0_10 = arith.constant 0 : index
    %13 = vector.load %arg6[%c0_9, %c0_10] : memref<1x32xf32, #tpu.memory_space<vmem>>, vector<1x32xf32>
    %14 = vector.broadcast %13 : vector<1x32xf32> to vector<16x32xf32>
    %15 = arith.mulf %1, %14 : vector<16x32xf32>
    %16 = arith.addf %12, %15 : vector<16x32xf32>
    %17 = arith.truncf %16 : vector<16x32xf32> to vector<16x32xbf16>
    %c0_11 = arith.constant 0 : index
    %c0_12 = arith.constant 0 : index
    %18 = vector.load %arg7[%c0_11, %c0_12] : memref<32x96xbf16, #tpu.memory_space<vmem>>, vector<32x96xbf16>
    %cst = arith.constant dense<0.000000e+00> : vector<16x96xf32>
    %19 = tpu.matmul %9, %18, %cst {dimension_numbers = #tpu.dot_dimension_numbers<[1], [0], [0], [1], [0, 0, 1, 1], [], []>} : vector<16x32xbf16>, vector<32x96xbf16>, vector<16x96xf32> -> vector<16x96xf32>
    %cst_13 = arith.constant 0.000000e+00 : f32
    %20 = vector.broadcast %cst_13 : f32 to vector<16x96xf32>
    %21 = arith.maximumf %19, %20 : vector<16x96xf32>
    %22 = arith.mulf %21, %21 : vector<16x96xf32>
    %23 = arith.truncf %22 : vector<16x96xf32> to vector<16x96xbf16>
    %c0_14 = arith.constant 0 : index
    %c0_15 = arith.constant 0 : index
    %24 = vector.load %arg9[%c0_14, %c0_15] : memref<96x32xbf16, #tpu.memory_space<vmem>>, vector<96x32xbf16>
    %cst_16 = arith.constant dense<0.000000e+00> : vector<16x32xf32>
    %25 = tpu.matmul %23, %24, %cst_16 {dimension_numbers = #tpu.dot_dimension_numbers<[1], [0], [0], [1], [0, 0, 1, 1], [], []>} : vector<16x96xbf16>, vector<96x32xbf16>, vector<16x32xf32> -> vector<16x32xf32>
    %c0_17 = arith.constant 0 : index
    %c0_18 = arith.constant 0 : index
    %26 = vector.load %arg8[%c0_17, %c0_18] : memref<32x32xbf16, #tpu.memory_space<vmem>>, vector<32x32xbf16>
    %cst_19 = arith.constant dense<0.000000e+00> : vector<16x32xf32>
    %27 = tpu.matmul %17, %26, %cst_19 {dimension_numbers = #tpu.dot_dimension_numbers<[1], [0], [0], [1], [0, 0, 1, 1], [], []>} : vector<16x32xbf16>, vector<32x32xbf16>, vector<16x32xf32> -> vector<16x32xf32>
    %28 = arith.negf %27 : vector<16x32xf32>
    %29 = math.exp %28 : vector<16x32xf32>
    %cst_20 = arith.constant 1.000000e+00 : f32
    %30 = vector.broadcast %cst_20 : f32 to vector<16x32xf32>
    %31 = arith.addf %30, %29 : vector<16x32xf32>
    %32 = arith.divf %30, %31 : vector<16x32xf32>
    %33 = arith.mulf %32, %25 : vector<16x32xf32>
    %c0_21 = arith.constant 0 : index
    %c0_22 = arith.constant 0 : index
    %34 = vector.load %arg10[%c0_21, %c0_22] : memref<16x32xf32, #tpu.memory_space<vmem>>, vector<16x32xf32>
    tpu.vector_store %arg10[%c0_21, %c0_22], %33 {strides = array<i32>} : memref<16x32xf32, #tpu.memory_space<vmem>>, vector<16x32xf32>,
    return
  }
  func.func @transform_0(%arg0: i32) -> (i32, i32) {
    %c0_i32 = arith.constant 0 : i32
    %c0_i32_0 = arith.constant 0 : i32
    return %arg0, %c0_i32 : i32, i32
  }
  func.func @transform_1(%arg0: i32) -> (i32, i32) {
    %c0_i32 = arith.constant 0 : i32
    %c0_i32_0 = arith.constant 0 : i32
    return %arg0, %c0_i32 : i32, i32
  }
  func.func @transform_2(%arg0: i32) -> (i32, i32) {
    %c0_i32 = arith.constant 0 : i32
    %c0_i32_0 = arith.constant 0 : i32
    %c0_i32_1 = arith.constant 0 : i32
    return %c0_i32, %c0_i32_0 : i32, i32
  }
  func.func @transform_3(%arg0: i32) -> (i32, i32) {
    %c0_i32 = arith.constant 0 : i32
    %c0_i32_0 = arith.constant 0 : i32
    %c0_i32_1 = arith.constant 0 : i32
    return %c0_i32, %c0_i32_0 : i32, i32
  }
  func.func @transform_4(%arg0: i32) -> (i32, i32) {
    %c0_i32 = arith.constant 0 : i32
    %c0_i32_0 = arith.constant 0 : i32
    %c0_i32_1 = arith.constant 0 : i32
    return %c0_i32, %c0_i32_0 : i32, i32
  }
  func.func @transform_5(%arg0: i32) -> (i32, i32) {
    %c0_i32 = arith.constant 0 : i32
    %c0_i32_0 = arith.constant 0 : i32
    %c0_i32_1 = arith.constant 0 : i32
    return %c0_i32, %c0_i32_0 : i32, i32
  }
  func.func @transform_6(%arg0: i32) -> (i32, i32) {
    %c0_i32 = arith.constant 0 : i32
    %c0_i32_0 = arith.constant 0 : i32
    %c0_i32_1 = arith.constant 0 : i32
    return %c0_i32, %c0_i32_0 : i32, i32
  }
  func.func @transform_7(%arg0: i32) -> (i32, i32) {
    %c0_i32 = arith.constant 0 : i32
    %c0_i32_0 = arith.constant 0 : i32
    %c0_i32_1 = arith.constant 0 : i32
    return %c0_i32, %c0_i32_0 : i32, i32
  }
  func.func @transform_8(%arg0: i32) -> (i32, i32) {
    %c0_i32 = arith.constant 0 : i32
    %c0_i32_0 = arith.constant 0 : i32
    %c0_i32_1 = arith.constant 0 : i32
    return %c0_i32, %c0_i32_0 : i32, i32
  }
  func.func @transform_9(%arg0: i32) -> (i32, i32) {
    %c0_i32 = arith.constant 0 : i32
    %c0_i32_0 = arith.constant 0 : i32
    return %arg0, %c0_i32 : i32, i32
  }
}

</mosaic_0001>

<llo_original>
// kernel: tpu_custom_call.1
$region0: #{tpu_custom_call.1}
  #allocation0 [shape = 'u32[]', space=smem, size = 0x4, offset = 0x4, fixed_abs, tag = 'smem constant byte address 0x4 - core index']
  #allocation1 [shape = 'u32[144,128]{1,0:T(1,128)}', space=vmem, size = 0x12000, scoped, tag = 'internal scratch']
  %s0 = inlined_call_operand.vmem [shape: f32[16,32], index: 0, kind: input, shape index: {}]
  %s1 = inlined_call_operand.vmem [shape: f32[16,32], index: 1, kind: input, shape index: {}]
  %s2 = inlined_call_operand.vmem [shape: f32[1,32], index: 2, kind: input, shape index: {}]
  %s3 = inlined_call_operand.vmem [shape: f32[1,32], index: 3, kind: input, shape index: {}]
  %s4 = inlined_call_operand.vmem [shape: f32[1,32], index: 4, kind: input, shape index: {}]
  %s5 = inlined_call_operand.vmem [shape: f32[1,32], index: 5, kind: input, shape index: {}]
  %s6 = inlined_call_operand.vmem [shape: bf16[32,96], index: 6, kind: input, shape index: {}]
  %s7 = inlined_call_operand.vmem [shape: bf16[32,32], index: 7, kind: input, shape index: {}]
  %s8 = inlined_call_operand.vmem [shape: bf16[96,32], index: 8, kind: input, shape index: {}]
  %s9 = inlined_call_operand.hbm [shape: f32[16,32], index: 9, kind: output, shape index: {}]
  %s10 = sld [smem:[#allocation0]]
  $region46: #{tpu_custom_call.1} parent=0
    _
  %s12 = ssub.s32 1, %s10
  %s13 = scalar_select 0, %s12, %s10
  $region1: #{tpu_custom_call.1} parent=0
    #allocation2 [shape = 'u8[8192]{0}', space=vmem, size = 0x2000, scoped, tag = 'output window, operand 0, single buffered']
    #allocation3 [shape = 's32[1]{0}', space=sflag, size = 0x4, scoped, tag = 'scoped memory for tpu_custom_call.1']
    %14 = vsyncpa [#allocation3], 0
    // Predicated region
    $region2: #{tpu_custom_call.1} parent=1 // pred_check
      _
    $region3: #{tpu_custom_call.1} parent=1 // pred_check_branch
      %16 = sbr.rel (0) target = $region5
    $region4: #{tpu_custom_call.1} parent=1 // pred_region
      _
    $region5: #{tpu_custom_call.1} parent=1 // pred_fallthru
      _
    // Predicated region
    $region6: #{tpu_custom_call.1} parent=1 // pred_check
      _
    $region7: #{tpu_custom_call.1} parent=1 // pred_check_branch
      %18 = sbr.rel (0) target = $region9
    $region8: #{tpu_custom_call.1} parent=1 // pred_region
      _
    $region9: #{tpu_custom_call.1} parent=1 // pred_fallthru
      _
    // Predicated region
    $region10: #{tpu_custom_call.1} parent=1 // pred_check
      _
    $region11: #{tpu_custom_call.1} parent=1 // pred_check_branch
      %20 = sbr.rel (0) target = $region13
    $region12: #{tpu_custom_call.1} parent=1 // pred_region
      _
    $region13: #{tpu_custom_call.1} parent=1 // pred_fallthru
      _
    // Predicated region
    $region14: #{tpu_custom_call.1} parent=1 // pred_check
      _
    $region15: #{tpu_custom_call.1} parent=1 // pred_check_branch
      %22 = sbr.rel (0) target = $region17
    $region16: #{tpu_custom_call.1} parent=1 // pred_region
      _
    $region17: #{tpu_custom_call.1} parent=1 // pred_fallthru
      _
    // Predicated region
    $region18: #{tpu_custom_call.1} parent=1 // pred_check
      _
    $region19: #{tpu_custom_call.1} parent=1 // pred_check_branch
      %24 = sbr.rel (0) target = $region21
    $region20: #{tpu_custom_call.1} parent=1 // pred_region
      _
    $region21: #{tpu_custom_call.1} parent=1 // pred_fallthru
      _
    // Predicated region
    $region22: #{tpu_custom_call.1} parent=1 // pred_check
      _
    $region23: #{tpu_custom_call.1} parent=1 // pred_check_branch
      %26 = sbr.rel (0) target = $region25
    $region24: #{tpu_custom_call.1} parent=1 // pred_region
      _
    $region25: #{tpu_custom_call.1} parent=1 // pred_fallthru
      _
    // Predicated region
    $region26: #{tpu_custom_call.1} parent=1 // pred_check
      _
    $region27: #{tpu_custom_call.1} parent=1 // pred_check_branch
      %28 = sbr.rel (0) target = $region29
    $region28: #{tpu_custom_call.1} parent=1 // pred_region
      _
    $region29: #{tpu_custom_call.1} parent=1 // pred_fallthru
      _
    // Predicated region
    $region30: #{tpu_custom_call.1} parent=1 // pred_check
      _
    $region31: #{tpu_custom_call.1} parent=1 // pred_check_branch
      %30 = sbr.rel (0) target = $region33
    $region32: #{tpu_custom_call.1} parent=1 // pred_region
      _
    $region33: #{tpu_custom_call.1} parent=1 // pred_fallthru
      _
    // Predicated region
    $region34: #{tpu_custom_call.1} parent=1 // pred_check
      _
    $region35: #{tpu_custom_call.1} parent=1 // pred_check_branch
      %32 = sbr.rel (0) target = $region37
    $region36: #{tpu_custom_call.1} parent=1 // pred_region
      _
    $region37: #{tpu_custom_call.1} parent=1 // pred_fallthru
      _
    %v34 = vld [vmem:[%s0] sm:$0xff]
    %v35 = vld [vmem:[%s0 + $0x8] sm:$0xff]
    %v36 = vld [vmem:[%s1] sm:$0xff]
    %v37 = vld [vmem:[%s1 + $0x8] sm:$0xff]
    %v38 = vld [vmem:[%s2] sm:$0x1]
    %v40 = vlaneseq
    %v41 = vshrl.u32 %v40, 7
    %v42 = vsub.s32 0, %v41
    %v43 = vrot.slane %v38, %v42
    %v45 = vmul.f32 %v34, %v43
    %v46 = vmul.f32 %v35, %v43
    %v47 = vld [vmem:[%s3] sm:$0x1]
    %v49 = vlaneseq
    %v50 = vshrl.u32 %v49, 7
    %v51 = vsub.s32 0, %v50
    %v52 = vrot.slane %v47, %v51
    %v54 = vmul.f32 %v36, %v52
    %v55 = vmul.f32 %v37, %v52
    %v56 = vadd.f32 %v45, %v54
    %v57 = vadd.f32 %v46, %v55
    %v58 = vpack.c.bf16 %v57, %v56
    %v59 = vld [vmem:[%s4] sm:$0x1]
    %v61 = vlaneseq
    %v62 = vshrl.u32 %v61, 7
    %v63 = vsub.s32 0, %v62
    %v64 = vrot.slane %v59, %v63
    %v66 = vmul.f32 %v34, %v64
    %v67 = vmul.f32 %v35, %v64
    %v68 = vld [vmem:[%s5] sm:$0x1]
    %v70 = vlaneseq
    %v71 = vshrl.u32 %v70, 7
    %v72 = vsub.s32 0, %v71
    %v73 = vrot.slane %v68, %v72
    %v75 = vmul.f32 %v36, %v73
    %v76 = vmul.f32 %v37, %v73
    %v77 = vadd.f32 %v66, %v75
    %v78 = vadd.f32 %v67, %v76
    %v79 = vpack.c.bf16 %v78, %v77
    %v80 = vld [vmem:[%s6] sm:$0xf]
    %v81 = vld [vmem:[%s6 + $0x4] sm:$0xf]
    %v82 = vld [vmem:[%s6 + $0x8] sm:$0xf]
    %v83 = vld [vmem:[%s6 + $0xc] sm:$0xf]
    %v88 = vunpack.c.l.b16 %v80
    %v89 = vunpack.c.l.b16 %v81
    %v90 = vunpack.c.l.b16 %v82
    %v91 = vunpack.c.l.b16 %v83
    %v92 = vpack.c.b16 %v89, %v88
    %v93 = vpack.c.b16 %v91, %v90
    %vm96 = vcmask 261120
    %v98 = vsel %vm96, %v58, 0
    %100 = vmatprep.subr.bf16.mxu0 0
    %101 = vmatpush1.bf16.msra.mxu0 %v92
    %102 = vmatprep.subr.bf16.mxu0 0
    %103 = vmatpush1.bf16.msra.mxu0 %v93
    %104 = vmatprep.subr.bf16.mxu0 0
    %105 = vmatpush1.bf16.msra.mxu0 0
    %106 = vmatprep.subr.bf16.mxu0 0
    %107 = vmatpush1.bf16.msra.mxu0 0
    %108 = vmatprep.subr.bf16.mxu0 0
    %109 = vmatpush1.bf16.msra.mxu0 0
    %110 = vmatprep.subr.bf16.mxu0 0
    %111 = vmatpush1.bf16.msra.mxu0 0
    %112 = vmatprep.subr.bf16.mxu0 0
    %113 = vmatpush1.bf16.msra.mxu0 0
    %114 = vmatprep.subr.bf16.mxu0 0
    %115 = vmatpush1.bf16.msra.mxu0 0
    %116 = vmatprep.subr.bf16.mxu0 0
    %117 = vmatpush1.bf16.msra.mxu0 0
    %118 = vmatprep.subr.bf16.mxu0 0
    %119 = vmatpush1.bf16.msra.mxu0 0
    %120 = vmatprep.subr.bf16.mxu0 0
    %121 = vmatpush1.bf16.msra.mxu0 0
    %122 = vmatprep.subr.bf16.mxu0 0
    %123 = vmatpush1.bf16.msra.mxu0 0
    %124 = vmatprep.subr.bf16.mxu0 0
    %125 = vmatpush1.bf16.msra.mxu0 0
    %126 = vmatprep.subr.bf16.mxu0 0
    %127 = vmatpush1.bf16.msra.mxu0 0
    %128 = vmatprep.subr.bf16.mxu0 0
    %129 = vmatpush1.bf16.msra.mxu0 0
    %130 = vmatprep.subr.bf16.mxu0 0
    %131 = vmatpush1.bf16.msra.mxu0 0
    %132 = vmatprep.mubr.bf16.mxu0 0
    %133 = vmatmul.mubr.bf16.gmra.mrb[0].mxu0 %v98
    %v134 = vpop.f32.mrb[0].mxu0
    %v135 = vadd.f32 0.0, %v134
    %v136 = vpop.f32.mrb[0].mxu0
    %v137 = vpop.f32.mrb[0].mxu0
    %v138 = vadd.f32 0.0, %v137
    %v139 = vpop.f32.mrb[0].mxu0
    %140 = vdwg.mxu0
    %v141 = vmax.f32 %v135, 0.0
    %v142 = vmax.f32 %v138, 0.0
    %v143 = vmul.f32 %v141, %v141
    %v144 = vmul.f32 %v142, %v142
    %v145 = vpack.c.bf16 %v144, %v143
    %v146 = vld [vmem:[%s8] sm:$0xf]
    %v147 = vld [vmem:[%s8 + $0x4] sm:$0xf]
    %v148 = vld [vmem:[%s8 + $0x8] sm:$0xf]
    %v149 = vld [vmem:[%s8 + $0xc] sm:$0xf]
    %v150 = vld [vmem:[%s8 + $0x10] sm:$0xf]
    %v151 = vld [vmem:[%s8 + $0x14] sm:$0xf]
    %v152 = vld [vmem:[%s8 + $0x18] sm:$0xf]
    %v153 = vld [vmem:[%s8 + $0x1c] sm:$0xf]
    %v154 = vld [vmem:[%s8 + $0x20] sm:$0xf]
    %v155 = vld [vmem:[%s8 + $0x24] sm:$0xf]
    %v156 = vld [vmem:[%s8 + $0x28] sm:$0xf]
    %v157 = vld [vmem:[%s8 + $0x2c] sm:$0xf]
    %v170 = vunpack.c.l.b16 %v146
    %v171 = vunpack.c.l.b16 %v147
    %v172 = vunpack.c.l.b16 %v148
    %v173 = vunpack.c.l.b16 %v149
    %v174 = vunpack.c.l.b16 %v150
    %v175 = vunpack.c.l.b16 %v151
    %v176 = vunpack.c.l.b16 %v152
    %v177 = vunpack.c.l.b16 %v153
    %v178 = vunpack.c.l.b16 %v154
    %v179 = vunpack.c.l.b16 %v155
    %v180 = vunpack.c.l.b16 %v156
    %v181 = vunpack.c.l.b16 %v157
    %v182 = vpack.c.b16 %v171, %v170
    %v183 = vpack.c.b16 %v173, %v172
    %v184 = vpack.c.b16 %v175, %v174
    %v185 = vpack.c.b16 %v177, %v176
    %v186 = vpack.c.b16 %v179, %v178
    %v187 = vpack.c.b16 %v181, %v180
    %vm194 = vcmask 785408
    %v196 = vsel %vm194, %v145, 0
    %198 = vmatprep.subr.bf16.mxu0 0
    %199 = vmatpush1.bf16.msra.mxu0 %v182
    %200 = vmatprep.subr.bf16.mxu0 0
    %201 = vmatpush1.bf16.msra.mxu0 %v183
    %202 = vmatprep.subr.bf16.mxu0 0
    %203 = vmatpush1.bf16.msra.mxu0 %v184
    %204 = vmatprep.subr.bf16.mxu0 0
    %205 = vmatpush1.bf16.msra.mxu0 %v185
    %206 = vmatprep.subr.bf16.mxu0 0
    %207 = vmatpush1.bf16.msra.mxu0 %v186
    %208 = vmatprep.subr.bf16.mxu0 0
    %209 = vmatpush1.bf16.msra.mxu0 %v187
    %210 = vmatprep.subr.bf16.mxu0 0
    %211 = vmatpush1.bf16.msra.mxu0 0
    %212 = vmatprep.subr.bf16.mxu0 0
    %213 = vmatpush1.bf16.msra.mxu0 0
    %214 = vmatprep.subr.bf16.mxu0 0
    %215 = vmatpush1.bf16.msra.mxu0 0
    %216 = vmatprep.subr.bf16.mxu0 0
    %217 = vmatpush1.bf16.msra.mxu0 0
    %218 = vmatprep.subr.bf16.mxu0 0
    %219 = vmatpush1.bf16.msra.mxu0 0
    %220 = vmatprep.subr.bf16.mxu0 0
    %221 = vmatpush1.bf16.msra.mxu0 0
    %222 = vmatprep.subr.bf16.mxu0 0
    %223 = vmatpush1.bf16.msra.mxu0 0
    %224 = vmatprep.subr.bf16.mxu0 0
    %225 = vmatpush1.bf16.msra.mxu0 0
    %226 = vmatprep.subr.bf16.mxu0 0
    %227 = vmatpush1.bf16.msra.mxu0 0
    %228 = vmatprep.subr.bf16.mxu0 0
    %229 = vmatpush1.bf16.msra.mxu0 0
    %230 = vmatprep.mubr.bf16.mxu0 0
    %231 = vmatmul.mubr.bf16.gmra.mrb[0].mxu0 %v196
    %v232 = vpop.f32.mrb[0].mxu0
    %v233 = vadd.f32 0.0, %v232
    %v234 = vpop.f32.mrb[0].mxu0
    %v235 = vpop.f32.mrb[0].mxu0
    %v236 = vadd.f32 0.0, %v235
    %v237 = vpop.f32.mrb[0].mxu0
    %238 = vdwg.mxu0
    %v239 = vld [vmem:[%s7] sm:$0xf]
    %v240 = vld [vmem:[%s7 + $0x4] sm:$0xf]
    %v241 = vld [vmem:[%s7 + $0x8] sm:$0xf]
    %v242 = vld [vmem:[%s7 + $0xc] sm:$0xf]
    %v247 = vunpack.c.l.b16 %v239
    %v248 = vunpack.c.l.b16 %v240
    %v249 = vunpack.c.l.b16 %v241
    %v250 = vunpack.c.l.b16 %v242
    %v251 = vpack.c.b16 %v248, %v247
    %v252 = vpack.c.b16 %v250, %v249
    %v256 = vsel %vm96, %v79, 0
    %258 = vmatprep.subr.bf16.mxu0 0
    %259 = vmatpush1.bf16.msra.mxu0 %v251
    %260 = vmatprep.subr.bf16.mxu0 0
    %261 = vmatpush1.bf16.msra.mxu0 %v252
    %262 = vmatprep.subr.bf16.mxu0 0
    %263 = vmatpush1.bf16.msra.mxu0 0
    %264 = vmatprep.subr.bf16.mxu0 0
    %265 = vmatpush1.bf16.msra.mxu0 0
    %266 = vmatprep.subr.bf16.mxu0 0
    %267 = vmatpush1.bf16.msra.mxu0 0
    %268 = vmatprep.subr.bf16.mxu0 0
    %269 = vmatpush1.bf16.msra.mxu0 0
    %270 = vmatprep.subr.bf16.mxu0 0
    %271 = vmatpush1.bf16.msra.mxu0 0
    %272 = vmatprep.subr.bf16.mxu0 0
    %273 = vmatpush1.bf16.msra.mxu0 0
    %274 = vmatprep.subr.bf16.mxu0 0
    %275 = vmatpush1.bf16.msra.mxu0 0
    %276 = vmatprep.subr.bf16.mxu0 0
    %277 = vmatpush1.bf16.msra.mxu0 0
    %278 = vmatprep.subr.bf16.mxu0 0
    %279 = vmatpush1.bf16.msra.mxu0 0
    %280 = vmatprep.subr.bf16.mxu0 0
    %281 = vmatpush1.bf16.msra.mxu0 0
    %282 = vmatprep.subr.bf16.mxu0 0
    %283 = vmatpush1.bf16.msra.mxu0 0
    %284 = vmatprep.subr.bf16.mxu0 0
    %285 = vmatpush1.bf16.msra.mxu0 0
    %286 = vmatprep.subr.bf16.mxu0 0
    %287 = vmatpush1.bf16.msra.mxu0 0
    %288 = vmatprep.subr.bf16.mxu0 0
    %289 = vmatpush1.bf16.msra.mxu0 0
    %290 = vmatprep.mubr.bf16.mxu0 0
    %291 = vmatmul.mubr.bf16.gmra.mrb[0].mxu0 %v256
    %v292 = vpop.f32.mrb[0].mxu0
    %v293 = vadd.f32 0.0, %v292
    %v294 = vpop.f32.mrb[0].mxu0
    %v295 = vpop.f32.mrb[0].mxu0
    %v296 = vadd.f32 0.0, %v295
    %v297 = vpop.f32.mrb[0].mxu0
    %298 = vdwg.mxu0
    %v299 = vxor.u32 %v293, 2147483648
    %v300 = vxor.u32 %v296, 2147483648
    %v301 = vmul.f32 %v299, 1.442695
    %v302 = vpow.pop %v301
    %v303 = vmul.f32 %v300, 1.442695
    %v304 = vpow.pop %v303
    %v305 = vadd.f32 %v302, 1.0
    %v306 = vadd.f32 %v304, 1.0
    %v307 = vrcp.pop %v305
    %v308 = vmul.f32 1.0, %v307
    %v309 = vrcp.pop %v306
    %v310 = vmul.f32 1.0, %v309
    %v311 = vmul.f32 %v308, %v233
    %v312 = vmul.f32 %v310, %v236
    %313 = vst.msk [vmem:[#allocation2] sm:$0xff] %vm96, %v311
    %314 = vst.msk [vmem:[#allocation2 + $0x8] sm:$0xff] %vm96, %v312
    // Predicated region
    $region38: #{tpu_custom_call.1} parent=1 // pred_check
      _
    $region39: #{tpu_custom_call.1} parent=1 // pred_check_branch
      %316 = sbr.rel (0) target = $region41
    $region40: #{tpu_custom_call.1} parent=1 // pred_region
      %s318 = ssub.s32 256, 256
      %319 = vsyncadd [#allocation3], %s318
      %s320 = sshll.u32 [#allocation2], 4
      %s321 = int_to_ptr.vmem [resolvable:$true] %s320
      %326 = dma.vmem_to_hbm [thread:$0]  %s321, 256, %s9, [#allocation3], 128, 128, 8
    $region41: #{tpu_custom_call.1} parent=1 // pred_fallthru
      _
    // Predicated region
    $region42: #{tpu_custom_call.1} parent=1 // pred_check
      _
    $region43: #{tpu_custom_call.1} parent=1 // pred_check_branch
      %328 = sbr.rel (0) target = $region45
    $region44: #{tpu_custom_call.1} parent=1 // pred_region
      %329 = dma.done [#allocation3], 256
    $region45: #{tpu_custom_call.1} parent=1 // pred_fallthru
      _
    %330 = vsyncpa [#allocation3], 1

</llo_original>
